<compile_context>
chip_gen: v7x
topology: tpu7x:2x2x1
jax: 0.10.0
libtpu: 0.0.40
codegen_flags: <defaults>
</compile_context>

<pallas_src>
import functools

import jax
import jax.numpy as jnp
from jax.experimental import pallas as pl
from jax.experimental.pallas import tpu as pltpu


def _conv1x1_kernel(x_ref, w_ref, b_ref, o_ref, *, relu, has_bias):
    # x_ref: (1, Cin, TL)   activation tile (one batch element, one L tile)
    # w_ref: (Cout, Cin)    full weight, resident across the grid
    # b_ref: (Cout, 1)      bias (zeros when has_bias=False; add skipped statically)
    # o_ref: (1, Cout, TL)  output tile, lane-dense along L
    y = jnp.dot(w_ref[...], x_ref[0], preferred_element_type=jnp.float32)
    if has_bias:
        y = y + b_ref[...]
    if relu:
        y = jnp.maximum(y, 0.0)
    o_ref[0] = y.astype(o_ref.dtype)


def initialized_conv1d(x, weight, bias=None, *, relu=False,
                       stride=1, padding=0, groups=1,
                       block_l=512, use_bf16_mxu=True):
    """Forward of Initialized_Conv1D.

    x:      (B, Cin, L)                      NCL layout, like PyTorch Conv1d input.
    weight: (Cout, Cin) or (Cout, Cin, 1)    1x1 conv weight.
    bias:   optional (Cout,) vector.
    """
    if weight.ndim == 3:
        assert weight.shape[-1] == 1, "only kernel_size=1 is implemented"
        weight = weight[..., 0]
    assert groups == 1, "groups != 1 not implemented"
    # TODO(synk): kernel_size > 1 / groups > 1 Conv1d variants are not mapped to
    # this 1x1-matmul kernel (the module's defaults are k=1, groups=1).

    if padding:
        x = jnp.pad(x, ((0, 0), (0, 0), (padding, padding)))
    if stride != 1:
        x = x[:, :, ::stride]

    B, Cin, L = x.shape
    Cout = weight.shape[0]
    assert weight.shape == (Cout, Cin)

    out_dtype = x.dtype
    mxu_dtype = (jnp.bfloat16 if (use_bf16_mxu and x.dtype == jnp.float32)
                 else x.dtype)
    x_in = x.astype(mxu_dtype)
    w_in = weight.astype(mxu_dtype)

    has_bias = bias is not None
    b_in = (bias.astype(jnp.float32).reshape(Cout, 1) if has_bias
            else jnp.zeros((Cout, 1), jnp.float32))

    # L tiling: 128-aligned lane tiles when L divides evenly, else one full-L block
    # (a full-extent block is always legal w.r.t. the (8,128) constraint).
    tl = block_l if (L > block_l and L % block_l == 0) else L
    grid = (B, L // tl)

    def _isz(dt):
        return jnp.dtype(dt).itemsize

    vmem_bytes = (2 * Cin * tl * _isz(mxu_dtype)      # x tile, double-buffered
                  + 2 * Cout * tl * _isz(out_dtype)   # out tile, double-buffered
                  + 2 * Cout * Cin * _isz(mxu_dtype)  # weight
                  + 2 * Cout * 4                      # bias
                  + Cout * tl * 4                     # f32 matmul result
                  + (2 << 20))                        # headroom
    vmem_limit = int(min(max(vmem_bytes, 4 << 20), 100 << 20))

    kern = functools.partial(_conv1x1_kernel, relu=relu, has_bias=has_bias)

    out = pl.pallas_call(
        kern,
        out_shape=jax.ShapeDtypeStruct((B, Cout, L), out_dtype),
        grid_spec=pltpu.PrefetchScalarGridSpec(
            num_scalar_prefetch=0,
            grid=grid,
            in_specs=[
                pl.BlockSpec((1, Cin, tl), lambda b, l: (b, 0, l)),   # x
                pl.BlockSpec((Cout, Cin), lambda b, l: (0, 0)),       # W
                pl.BlockSpec((Cout, 1), lambda b, l: (0, 0)),         # bias
            ],
            out_specs=pl.BlockSpec((1, Cout, tl), lambda b, l: (b, 0, l)),
        ),
        compiler_params=pltpu.CompilerParams(
            dimension_semantics=("parallel", "parallel"),
            vmem_limit_bytes=vmem_limit),
    )(x_in, w_in, b_in)
    return out


if __name__ == "__main__":
    key = jax.random.PRNGKey(0)
    k1, k2, k3, k4 = jax.random.split(key, 4)

    # Small config consistent with the module defaults (k=1, bias=False).
    B, Cin, Cout, L = 2, 32, 64, 16
    x = jax.random.normal(k1, (B, Cin, L), jnp.float32)
    # xavier_normal_-style scale for a (Cout, Cin, 1) conv weight.
    std_xavier = (2.0 / (Cin + Cout)) ** 0.5
    w = jax.random.normal(k2, (Cout, Cin), jnp.float32) * std_xavier
    ref = jnp.einsum("oc,bcl->bol", w, x)

    # Default bf16-MXU path (f32 accumulation).
    out = jax.block_until_ready(initialized_conv1d(x, w))
    assert out.shape == (B, Cout, L), out.shape
    assert bool(jnp.all(jnp.isfinite(out)))
    assert bool(jnp.allclose(out, ref, rtol=5e-2, atol=5e-2))

    # Exact f32 path matches the reference tightly.
    out_f32 = jax.block_until_ready(initialized_conv1d(x, w, use_bf16_mxu=False))
    assert bool(jnp.allclose(out_f32, ref, rtol=1e-5, atol=1e-5))

    # relu=True branch (kaiming_normal_-style init scale).
    std_kaiming = (2.0 / Cin) ** 0.5
    w_r = jax.random.normal(k3, (Cout, Cin), jnp.float32) * std_kaiming
    out_r = jax.block_until_ready(initialized_conv1d(x, w_r, relu=True))
    ref_r = jnp.maximum(jnp.einsum("oc,bcl->bol", w_r, x), 0.0)
    assert bool(jnp.allclose(out_r, ref_r, rtol=5e-2, atol=5e-2))

    # Larger, 128-aligned config exercising the (batch, L-tiles) parallel grid.
    B2, C2, L2 = 2, 128, 1024
    x2 = jax.random.normal(k4, (B2, C2, L2), jnp.float32)
    w2 = jax.random.normal(k2, (C2, C2), jnp.float32) * (2.0 / (2 * C2)) ** 0.5
    out2 = jax.block_until_ready(initialized_conv1d(x2, w2, block_l=512))
    ref2 = jnp.einsum("oc,bcl->bol", w2, x2)
    assert out2.shape == (B2, C2, L2), out2.shape
    assert bool(jnp.allclose(out2, ref2, rtol=5e-2, atol=5e-2))

    print("KERNEL_OK")
</pallas_src>

<mosaic_0001>
module attributes {stable_mosaic.version = 11 : i64} {
  func.func @_conv1x1_kernel(%arg0: i32, %arg1: i32, %arg2: memref<1x32x16xbf16, #tpu.memory_space<vmem>>, %arg3: memref<64x32xbf16, #tpu.memory_space<vmem>>, %arg4: memref<64x1xf32, #tpu.memory_space<vmem>>, %arg5: memref<1x64x16xf32, #tpu.memory_space<vmem>>) attributes {dimension_semantics = [#tpu.dimension_semantics<parallel>, #tpu.dimension_semantics<parallel>], iteration_bounds = array<i64: 2, 1>, scalar_prefetch = 0 : i64, scratch_operands = 0 : i64, tpu.core_type = #tpu.core_type<tc>, window_params = [{transform_indices = @transform_0, window_bounds = array<i64: 1, 32, 16>}, {pipeline_mode = #tpu.pipeline_mode<synchronous>, transform_indices = @transform_1, window_bounds = array<i64: 64, 32>}, {pipeline_mode = #tpu.pipeline_mode<synchronous>, transform_indices = @transform_2, window_bounds = array<i64: 64, 1>}, {transform_indices = @transform_3, window_bounds = array<i64: 1, 64, 16>}]} {
    %c0 = arith.constant 0 : index
    %c0_0 = arith.constant 0 : index
    %0 = vector.load %arg3[%c0, %c0_0] : memref<64x32xbf16, #tpu.memory_space<vmem>>, vector<64x32xbf16>
    %c0_1 = arith.constant 0 : index
    %c0_2 = arith.constant 0 : index
    %c0_3 = arith.constant 0 : index
    %1 = vector.load %arg2[%c0_1, %c0_2, %c0_3] : memref<1x32x16xbf16, #tpu.memory_space<vmem>>, vector<1x32x16xbf16>
    %2 = vector.shape_cast %1 : vector<1x32x16xbf16> to vector<32x16xbf16>
    %cst = arith.constant dense<0.000000e+00> : vector<64x16xf32>
    %3 = tpu.matmul %0, %2, %cst {dimension_numbers = #tpu.dot_dimension_numbers<[1], [0], [0], [1], [0, 0, 1, 1], [], []>} : vector<64x32xbf16>, vector<32x16xbf16>, vector<64x16xf32> -> vector<64x16xf32>
    %c0_4 = arith.constant 0 : index
    %c0_5 = arith.constant 0 : index
    %c0_6 = arith.constant 0 : index
    %4 = vector.load %arg5[%c0_4, %c0_5, %c0_6] : memref<1x64x16xf32, #tpu.memory_space<vmem>>, vector<1x64x16xf32>
    %5 = vector.shape_cast %4 : vector<1x64x16xf32> to vector<64x16xf32>
    %6 = vector.shape_cast %3 : vector<64x16xf32> to vector<1x64x16xf32>
    tpu.vector_store %arg5[%c0_4, %c0_5, %c0_6], %6 {strides = array<i32>} : memref<1x64x16xf32, #tpu.memory_space<vmem>>, vector<1x64x16xf32>,
    return
  }
  func.func @transform_0(%arg0: i32, %arg1: i32) -> (i32, i32, i32) {
    %c0_i32 = arith.constant 0 : i32
    %c0_i32_0 = arith.constant 0 : i32
    return %arg0, %c0_i32, %arg1 : i32, i32, i32
  }
  func.func @transform_1(%arg0: i32, %arg1: i32) -> (i32, i32) {
    %c0_i32 = arith.constant 0 : i32
    %c0_i32_0 = arith.constant 0 : i32
    %c0_i32_1 = arith.constant 0 : i32
    return %c0_i32, %c0_i32_0 : i32, i32
  }
  func.func @transform_2(%arg0: i32, %arg1: i32) -> (i32, i32) {
    %c0_i32 = arith.constant 0 : i32
    %c0_i32_0 = arith.constant 0 : i32
    %c0_i32_1 = arith.constant 0 : i32
    return %c0_i32, %c0_i32_0 : i32, i32
  }
  func.func @transform_3(%arg0: i32, %arg1: i32) -> (i32, i32, i32) {
    %c0_i32 = arith.constant 0 : i32
    %c0_i32_0 = arith.constant 0 : i32
    return %arg0, %c0_i32, %arg1 : i32, i32, i32
  }
}

</mosaic_0001>

<llo_original>
// kernel: tpu_custom_call.1
$region0: #{tpu_custom_call.1}
  #allocation0 [shape = 'u32[]', space=smem, size = 0x4, offset = 0x4, fixed_abs, tag = 'smem constant byte address 0x4 - core index']
  #allocation1 [shape = 'u32[144,128]{1,0:T(1,128)}', space=vmem, size = 0x12000, scoped, tag = 'internal scratch']
  %s0 = inlined_call_operand.vmem [shape: bf16[2,32,16], index: 0, kind: input, shape index: {}]
  %s1 = inlined_call_operand.vmem [shape: bf16[64,32], index: 1, kind: input, shape index: {}]
  %s2 = inlined_call_operand.vmem [shape: f32[64,1], index: 2, kind: input, shape index: {}]
  %s3 = inlined_call_operand.vmem [shape: f32[2,64,16], index: 3, kind: output, shape index: {}]
  %s4 = sld [smem:[#allocation0]]
  $region45: #{tpu_custom_call.1} parent=0
    _
  %s6 = ssub.s32 1, %s4
  %s7 = scalar_select 0, %s6, %s4
  loop: start=0, step=1, limit=4
  $region2: #{tpu_custom_call.1} parent=0 // loop_pre_header
    _
  $region3: #{tpu_custom_call.1} parent=0 // loop_header
    %s9 = sphi 0, %s13
    %p10 = scmp.ge.s32.totalorder %s9, 4
    %s16 = sphi 0, %s28
    %s17 = sphi 0, %s24
    %s18 = sphi 0, %s16
    %s19 = sphi 0, %s17
    %s20 = sphi 0, %s18
    %s21 = sphi 0, %s19
    %s33 = sphi 0, %s35
    %s36 = sphi 0, %s33
    %s37 = sphi 0, %s36
    %s53 = sphi 0, %s37
    %s57 = sphi 0, %s57
    %s59 = sphi 0, %s57
    %s60 = sphi 0, %s59
    %s74 = sphi 0, %s60
    %s78 = sphi 0, %s78
    %s80 = sphi 0, %s78
    %s81 = sphi 0, %s80
    %s95 = sphi 0, %s81
    %s103 = sphi 0, %s105
    %s106 = sphi 0, %s103
    %s107 = sphi 0, %s106
    %s123 = sphi 0, %s107
  $region4: #{tpu_custom_call.1} parent=0 // loop_header_branch
    %12 = sbr.rel (%p10) target = $region8
  $region5: #{tpu_custom_call.1} parent=0 // loop_body
    %s14 = ssub.s32 %s9, 1
    %s15 = ssub.s32 %s9, 2
    %s22 = sadd.s32 1, %s17
    %p23 = scmp.ge.s32.totalorder %s22, 1
    %s24 = scalar_select %p23, 0, %s22
    %s25 = sadd.s32 1, %s16
    %s26 = scalar_select %p23, %s25, %s16
    %p27 = scmp.ge.s32.totalorder %s26, 2
    %s28 = scalar_select %p27, 0, %s26
    %s29 = ssub.s32 %s16, %s28
    %s30 = ssub.s32 %s17, %s24
    %s31 = sor.u32 %s29, %s30
    %p32 = scmp.eq.s32.totalorder %s31, 0
    %s34 = sadd.s32 %s33, 1
    %s35 = scalar_select %p32, %s33, %s34
    %p38 = pneg %p32
    %p39 = scmp.eq.s32.totalorder %s9, 1
    %p40 = por %p38, %p39
    %p41 = scmp.ne.s32.totalorder %s33, %s36
    %p42 = scmp.eq.s32.totalorder %s9, 0
    %p43 = por %p41, %p42
    %p44 = scmp.ne.s32.totalorder %s33, %s36
    %p45 = scmp.eq.s32.totalorder %s14, 1
    %p46 = por %p44, %p45
    %p47 = scmp.ne.s32.totalorder %s36, %s37
    %p48 = scmp.eq.s32.totalorder %s14, 0
    %p49 = por %p47, %p48
    %p50 = scmp.ne.s32.totalorder %s36, %s37
    %p51 = scmp.eq.s32.totalorder %s15, 1
    %p52 = por %p50, %p51
    %p54 = scmp.ne.s32.totalorder %s37, %s53
    %p55 = scmp.eq.s32.totalorder %s15, 0
    %p56 = por %p54, %p55
    %s58 = sadd.s32 %s57, 1
    %p61 = scmp.eq.s32.totalorder %s9, 1
    %p62 = scmp.ne.s32.totalorder %s57, %s59
    %p63 = scmp.eq.s32.totalorder %s9, 0
    %p64 = por %p62, %p63
    %p65 = scmp.ne.s32.totalorder %s57, %s59
    %p66 = scmp.eq.s32.totalorder %s14, 1
    %p67 = por %p65, %p66
    %p68 = scmp.ne.s32.totalorder %s59, %s60
    %p69 = scmp.eq.s32.totalorder %s14, 0
    %p70 = por %p68, %p69
    %p71 = scmp.ne.s32.totalorder %s59, %s60
    %p72 = scmp.eq.s32.totalorder %s15, 1
    %p73 = por %p71, %p72
    %p75 = scmp.ne.s32.totalorder %s60, %s74
    %p76 = scmp.eq.s32.totalorder %s15, 0
    %p77 = por %p75, %p76
    %s79 = sadd.s32 %s78, 1
    %p82 = scmp.eq.s32.totalorder %s9, 1
    %p83 = scmp.ne.s32.totalorder %s78, %s80
    %p84 = scmp.eq.s32.totalorder %s9, 0
    %p85 = por %p83, %p84
    %p86 = scmp.ne.s32.totalorder %s78, %s80
    %p87 = scmp.eq.s32.totalorder %s14, 1
    %p88 = por %p86, %p87
    %p89 = scmp.ne.s32.totalorder %s80, %s81
    %p90 = scmp.eq.s32.totalorder %s14, 0
    %p91 = por %p89, %p90
    %p92 = scmp.ne.s32.totalorder %s80, %s81
    %p93 = scmp.eq.s32.totalorder %s15, 1
    %p94 = por %p92, %p93
    %p96 = scmp.ne.s32.totalorder %s81, %s95
    %p97 = scmp.eq.s32.totalorder %s15, 0
    %p98 = por %p96, %p97
    %s99 = ssub.s32 %s16, %s28
    %s100 = ssub.s32 %s17, %s24
    %s101 = sor.u32 %s99, %s100
    %p102 = scmp.eq.s32.totalorder %s101, 0
    %s104 = sadd.s32 %s103, 1
    %s105 = scalar_select %p102, %s103, %s104
    %p108 = pneg %p102
    %p109 = scmp.eq.s32.totalorder %s9, 1
    %p110 = por %p108, %p109
    %p111 = scmp.ne.s32.totalorder %s103, %s106
    %p112 = scmp.eq.s32.totalorder %s9, 0
    %p113 = por %p111, %p112
    %p114 = scmp.ne.s32.totalorder %s103, %s106
    %p115 = scmp.eq.s32.totalorder %s14, 1
    %p116 = por %p114, %p115
    %p117 = scmp.ne.s32.totalorder %s106, %s107
    %p118 = scmp.eq.s32.totalorder %s14, 0
    %p119 = por %p117, %p118
    %p120 = scmp.ne.s32.totalorder %s106, %s107
    %p121 = scmp.eq.s32.totalorder %s15, 1
    %p122 = por %p120, %p121
    %p124 = scmp.ne.s32.totalorder %s107, %s123
    %p125 = scmp.eq.s32.totalorder %s15, 0
    %p126 = por %p124, %p125
    %p127 = scmp.le.s32.totalorder 1, %s9
    %p128 = scmp.lt.s32.totalorder %s9, 3
    %p129 = pnand %p127, %p128
    %p130 = pneg %p129
    // Predicated region
    $region9: #{tpu_custom_call.1} parent=5 // pred_check
      _
    $region10: #{tpu_custom_call.1} parent=5 // pred_check_branch
      %132 = sbr.rel (%p129) target = $region12
    $region11: #{tpu_custom_call.1} parent=5 // pred_region
      %s133 = ssub.s32 %s9, 1
      // Predicated region
      $region13: #{tpu_custom_call.1} parent=11 // pred_check
        %p134 = pneg %p70
      $region14: #{tpu_custom_call.1} parent=11 // pred_check_branch
        %136 = sbr.rel (%p134) target = $region16
      $region15: #{tpu_custom_call.1} parent=11 // pred_region
        _
      $region16: #{tpu_custom_call.1} parent=11 // pred_fallthru
        _
      // Predicated region
      $region17: #{tpu_custom_call.1} parent=11 // pred_check
        %p137 = pneg %p91
      $region18: #{tpu_custom_call.1} parent=11 // pred_check_branch
        %139 = sbr.rel (%p137) target = $region20
      $region19: #{tpu_custom_call.1} parent=11 // pred_region
        _
      $region20: #{tpu_custom_call.1} parent=11 // pred_fallthru
        _
    $region12: #{tpu_custom_call.1} parent=5 // pred_fallthru
      _
    %p140 = scmp.lt.s32.totalorder %s9, 2
    // Predicated region
    $region21: #{tpu_custom_call.1} parent=5 // pred_check
      %p141 = pneg %p140
    $region22: #{tpu_custom_call.1} parent=5 // pred_check_branch
      %143 = sbr.rel (%p141) target = $region24
    $region23: #{tpu_custom_call.1} parent=5 // pred_region
      // Predicated region
      $region25: #{tpu_custom_call.1} parent=23 // pred_check
        %p144 = pneg %p43
      $region26: #{tpu_custom_call.1} parent=23 // pred_check_branch
        %146 = sbr.rel (%p144) target = $region28
      $region27: #{tpu_custom_call.1} parent=23 // pred_region
        %p147 = scmp.lt.s32.totalorder %s16, 1
        %s148 = scalar_select %p147, %s16, 1
        %p149 = scmp.lt.s32.totalorder %s17, 0
        %s150 = scalar_select %p149, %s17, 0
        %s151 = smul.addr %s148, 4
        %s152 = sadd.s32 %s150, %s151
        %s153 = smul.addr %s152, 4
        %s154 = scalar_lea.vmem %s0, %s153
      $region28: #{tpu_custom_call.1} parent=23 // pred_fallthru
        _
    $region24: #{tpu_custom_call.1} parent=5 // pred_fallthru
      _
    %p155 = scmp.le.s32.totalorder 1, %s9
    %p156 = scmp.lt.s32.totalorder %s9, 3
    %p157 = pnand %p155, %p156
    %p158 = pneg %p157
    // Predicated region
    $region29: #{tpu_custom_call.1} parent=5 // pred_check
      _
    $region30: #{tpu_custom_call.1} parent=5 // pred_check_branch
      %160 = sbr.rel (%p157) target = $region32
    $region31: #{tpu_custom_call.1} parent=5 // pred_region
      %s161 = ssub.s32 %s9, 1
      %p162 = scmp.lt.s32.totalorder %s18, 1
      %s163 = scalar_select %p162, %s18, 1
      %p164 = scmp.lt.s32.totalorder %s19, 0
      %s165 = scalar_select %p164, %s19, 0
      %s166 = smul.addr %s163, 4
      %s167 = sadd.s32 %s165, %s166
      %s168 = smul.addr %s167, 4
      %s169 = scalar_lea.vmem %s0, %s168
      %p170 = pneg %p49
      %p171 = pneg %p46
      %p172 = pneg %p70
      %p173 = pneg %p67
      %p174 = pneg %p91
      %p175 = pneg %p88
      %p176 = pneg %p119
      %p177 = pneg %p116
      %p178 = scmp.lt.s32.totalorder %s18, 1
      %s179 = scalar_select %p178, %s18, 1
      %p180 = scmp.lt.s32.totalorder %s19, 0
      %s181 = scalar_select %p180, %s19, 0
      %s182 = smul.addr %s179, 8
      %s183 = sadd.s32 %s181, %s182
      %s184 = smul.addr %s183, 8
      %s185 = scalar_lea.vmem %s3, %s184
      %p186 = scmp.lt.s32.totalorder %s18, 1
      %s187 = scalar_select %p186, %s18, 1
      %p188 = scmp.lt.s32.totalorder %s19, 0
      %s189 = scalar_select %p188, %s19, 0
      %s190 = smul.addr %s187, 4
      %s191 = sadd.s32 %s189, %s190
      %s192 = smul.addr %s191, 4
      %s193 = scalar_lea.vmem %s0, %s192
      %p194 = scmp.lt.s32.totalorder %s18, 1
      %s195 = scalar_select %p194, %s18, 1
      %p196 = scmp.lt.s32.totalorder %s19, 0
      %s197 = scalar_select %p196, %s19, 0
      %s198 = smul.addr %s195, 8
      %s199 = sadd.s32 %s197, %s198
      %s200 = smul.addr %s199, 8
      %s201 = scalar_lea.vmem %s3, %s200
      %v203 = vld [vmem:[%s1] sm:$0xf]
      %v204 = vld [vmem:[%s1 + $0x4] sm:$0xf]
      %v205 = vld [vmem:[%s1 + $0x8] sm:$0xf]
      %v206 = vld [vmem:[%s1 + $0xc] sm:$0xf]
      %v207 = vld [vmem:[%s1 + $0x10] sm:$0xf]
      %v208 = vld [vmem:[%s1 + $0x14] sm:$0xf]
      %v209 = vld [vmem:[%s1 + $0x18] sm:$0xf]
      %v210 = vld [vmem:[%s1 + $0x1c] sm:$0xf]
      %v211 = vld [vmem:[%s193] sm:$0xf]
      %v212 = vld [vmem:[%s193 + $0x4] sm:$0xf]
      %v213 = vld [vmem:[%s193 + $0x8] sm:$0xf]
      %v214 = vld [vmem:[%s193 + $0xc] sm:$0xf]
      %v223 = vunpack.c.l.b16 %v203
      %v224 = vunpack.c.l.b16 %v204
      %v225 = vunpack.c.l.b16 %v205
      %v226 = vunpack.c.l.b16 %v206
      %v227 = vunpack.c.l.b16 %v207
      %v228 = vunpack.c.l.b16 %v208
      %v229 = vunpack.c.l.b16 %v209
      %v230 = vunpack.c.l.b16 %v210
      %v231 = vpack.c.b16 %v224, %v223
      %v232 = vpack.c.b16 %v226, %v225
      %v233 = vpack.c.b16 %v228, %v227
      %v234 = vpack.c.b16 %v230, %v229
      %v239 = vunpack.c.l.b16 %v211
      %v240 = vunpack.c.l.b16 %v212
      %v241 = vunpack.c.l.b16 %v213
      %v242 = vunpack.c.l.b16 %v214
      %v243 = vpack.c.b16 %v240, %v239
      %v244 = vpack.c.b16 %v242, %v241
      %vm247 = vcmask 261120
      %v249 = vsel %vm247, %v231, 0
      %v252 = vsel %vm247, %v232, 0
      %v255 = vsel %vm247, %v233, 0
      %v258 = vsel %vm247, %v234, 0
      %260 = vmatprep.subr.bf16.mxu0 0
      %261 = vmatpush1.bf16.msra.mxu0 %v243
      %262 = vmatprep.subr.bf16.mxu0 0
      %263 = vmatpush1.bf16.msra.mxu0 %v244
      %264 = vmatprep.subr.bf16.mxu0 0
      %265 = vmatpush1.bf16.msra.mxu0 0
      %266 = vmatprep.subr.bf16.mxu0 0
      %267 = vmatpush1.bf16.msra.mxu0 0
      %268 = vmatprep.subr.bf16.mxu0 0
      %269 = vmatpush1.bf16.msra.mxu0 0
      %270 = vmatprep.subr.bf16.mxu0 0
      %271 = vmatpush1.bf16.msra.mxu0 0
      %272 = vmatprep.subr.bf16.mxu0 0
      %273 = vmatpush1.bf16.msra.mxu0 0
      %274 = vmatprep.subr.bf16.mxu0 0
      %275 = vmatpush1.bf16.msra.mxu0 0
      %276 = vmatprep.subr.bf16.mxu0 0
      %277 = vmatpush1.bf16.msra.mxu0 0
      %278 = vmatprep.subr.bf16.mxu0 0
      %279 = vmatpush1.bf16.msra.mxu0 0
      %280 = vmatprep.subr.bf16.mxu0 0
      %281 = vmatpush1.bf16.msra.mxu0 0
      %282 = vmatprep.subr.bf16.mxu0 0
      %283 = vmatpush1.bf16.msra.mxu0 0
      %284 = vmatprep.subr.bf16.mxu0 0
      %285 = vmatpush1.bf16.msra.mxu0 0
      %286 = vmatprep.subr.bf16.mxu0 0
      %287 = vmatpush1.bf16.msra.mxu0 0
      %288 = vmatprep.subr.bf16.mxu0 0
      %289 = vmatpush1.bf16.msra.mxu0 0
      %290 = vmatprep.subr.bf16.mxu0 0
      %291 = vmatpush1.bf16.msra.mxu0 0
      %292 = vmatprep.mubr.bf16.mxu0 0
      %293 = vmatmul.mubr.bf16.gmra.mrb[0].mxu0 %v249
      %v294 = vpop.f32.mrb[0].mxu0
      %v295 = vadd.f32 0.0, %v294
      %v296 = vpop.f32.mrb[0].mxu0
      %v297 = vpop.f32.mrb[0].mxu0
      %v298 = vadd.f32 0.0, %v297
      %v299 = vpop.f32.mrb[0].mxu0
      %300 = vmatprep.mubr.bf16.mxu0 0
      %301 = vmatmul.mubr.bf16.gmra.mrb[0].mxu0 %v252
      %v302 = vpop.f32.mrb[0].mxu0
      %v303 = vadd.f32 0.0, %v302
      %v304 = vpop.f32.mrb[0].mxu0
      %v305 = vpop.f32.mrb[0].mxu0
      %v306 = vadd.f32 0.0, %v305
      %v307 = vpop.f32.mrb[0].mxu0
      %308 = vmatprep.mubr.bf16.mxu0 0
      %309 = vmatmul.mubr.bf16.gmra.mrb[0].mxu0 %v255
      %v310 = vpop.f32.mrb[0].mxu0
      %v311 = vadd.f32 0.0, %v310
      %v312 = vpop.f32.mrb[0].mxu0
      %v313 = vpop.f32.mrb[0].mxu0
      %v314 = vadd.f32 0.0, %v313
      %v315 = vpop.f32.mrb[0].mxu0
      %316 = vmatprep.mubr.bf16.mxu0 0
      %317 = vmatmul.mubr.bf16.gmra.mrb[0].mxu0 %v258
      %v318 = vpop.f32.mrb[0].mxu0
      %v319 = vadd.f32 0.0, %v318
      %v320 = vpop.f32.mrb[0].mxu0
      %v321 = vpop.f32.mrb[0].mxu0
      %v322 = vadd.f32 0.0, %v321
      %v323 = vpop.f32.mrb[0].mxu0
      %324 = vdwg.mxu0
      %vm325 = vcmask 130048
      %326 = vst.msk [vmem:[%s201] sm:$0xff] %vm325, %v295
      %327 = vst.msk [vmem:[%s201 + $0x8] sm:$0xff] %vm325, %v298
      %328 = vst.msk [vmem:[%s201 + $0x10] sm:$0xff] %vm325, %v303
      %329 = vst.msk [vmem:[%s201 + $0x18] sm:$0xff] %vm325, %v306
      %330 = vst.msk [vmem:[%s201 + $0x20] sm:$0xff] %vm325, %v311
      %331 = vst.msk [vmem:[%s201 + $0x28] sm:$0xff] %vm325, %v314
      %332 = vst.msk [vmem:[%s201 + $0x30] sm:$0xff] %vm325, %v319
      %333 = vst.msk [vmem:[%s201 + $0x38] sm:$0xff] %vm325, %v322
      %p334 = scmp.lt.s32.totalorder %s18, 1
      %s335 = scalar_select %p334, %s18, 1
      %p336 = scmp.lt.s32.totalorder %s19, 0
      %s337 = scalar_select %p336, %s19, 0
      %s338 = smul.addr %s335, 8
      %s339 = sadd.s32 %s337, %s338
      %s340 = smul.addr %s339, 8
      %s341 = scalar_lea.vmem %s3, %s340
      // Predicated region
      $region33: #{tpu_custom_call.1} parent=31 // pred_check
        %p342 = pneg %p116
      $region34: #{tpu_custom_call.1} parent=31 // pred_check_branch
        %344 = sbr.rel (%p342) target = $region36
      $region35: #{tpu_custom_call.1} parent=31 // pred_region
        _
      $region36: #{tpu_custom_call.1} parent=31 // pred_fallthru
        _
    $region32: #{tpu_custom_call.1} parent=5 // pred_fallthru
      _
    %p345 = scmp.le.s32.totalorder 2, %s9
    // Predicated region
    $region37: #{tpu_custom_call.1} parent=5 // pred_check
      %p346 = pneg %p345
    $region38: #{tpu_custom_call.1} parent=5 // pred_check_branch
      %348 = sbr.rel (%p346) target = $region40
    $region39: #{tpu_custom_call.1} parent=5 // pred_region
      %s349 = ssub.s32 %s9, 2
      // Predicated region
      $region41: #{tpu_custom_call.1} parent=39 // pred_check
        %p350 = pneg %p122
      $region42: #{tpu_custom_call.1} parent=39 // pred_check_branch
        %352 = sbr.rel (%p350) target = $region44
      $region43: #{tpu_custom_call.1} parent=39 // pred_region
        %p353 = scmp.lt.s32.totalorder %s20, 1
        %s354 = scalar_select %p353, %s20, 1
        %p355 = scmp.lt.s32.totalorder %s21, 0
        %s356 = scalar_select %p355, %s21, 0
        %s357 = smul.addr %s354, 8
        %s358 = sadd.s32 %s356, %s357
        %s359 = smul.addr %s358, 8
        %s360 = scalar_lea.vmem %s3, %s359
      $region44: #{tpu_custom_call.1} parent=39 // pred_fallthru
        _
    $region40: #{tpu_custom_call.1} parent=5 // pred_fallthru
      _
  $region6: #{tpu_custom_call.1} parent=0 // loop_footer
    %s13 = sadd.s32 1, %s9
  $region7: #{tpu_custom_call.1} parent=0 // loop_footer_branch
    %8 = sbr.rel target = $region3
  $region8: #{tpu_custom_call.1} parent=0 // loop_exit
    _

</llo_original>
